<compile_context>
chip_gen: v6e
topology: v6e:2x2x1
jax: 0.10.0
libtpu: 0.0.40
codegen_flags: <defaults>
</compile_context>

<pallas_src>
import jax
import jax.numpy as jnp
from jax.experimental import pallas as pl
from jax.experimental.pallas import tpu as pltpu


def _identity_copy_kernel(x_ref, o_ref):
    # Pure pass-through: BasePolicy.forward performs no compute.
    o_ref[...] = x_ref[...]


def base_policy_forward(
    data: jax.Array,
    *,
    force_kernel: bool = False,
    target_block_bytes: int = 2 * 1024 * 1024,
) -> jax.Array:
    """Identity forward (BasePolicy.forward is an abstract no-op).

    Default is a zero-copy pass-through.  With ``force_kernel=True`` the copy
    is materialized through a tiled, lane-dense Pallas VMEM copy kernel.
    """
    if not force_kernel:
        # Fastest correct identity: no kernel, no HBM traffic.
        return data

    n = data.size
    if n == 0:
        return data

    # Lane-dense flattening: view the flat element stream as (rows, C) with C
    # a wide multiple of 128 so every DMA and vector store is full-width.
    lane_width = None
    for c in (4096, 2048, 1024, 512, 256, 128):
        if n % c == 0:
            lane_width = c
            break
    if lane_width is None:
        # Ragged element count: a padded copy would only add HBM traffic.
        # Identity semantics are preserved by returning the input directly.
        return data

    rows = n // lane_width
    flat = data.reshape(rows, lane_width)  # metadata-only reshape, no copy

    itemsize = jnp.dtype(flat.dtype).itemsize
    # Rows per packed vreg for this dtype: 8 (32-bit), 16 (bf16), 32 (int8).
    sublane_pack = 8 * max(1, 4 // itemsize)

    if rows <= sublane_pack:
        # Tiny input: one full-array block (block shape == full array dims, so
        # the (8, 128) divisibility rule does not apply).
        tile_rows = rows
        grid = (1,)
    else:
        row_bytes = lane_width * itemsize
        # ~target_block_bytes per block, rounded to the packed sublane count.
        tile_rows = max(sublane_pack, target_block_bytes // row_bytes)
        tile_rows = (tile_rows // sublane_pack) * sublane_pack
        # Keep at least 2 grid steps so both v7x TensorCores get work.
        half_rows = (rows // 2 // sublane_pack) * sublane_pack
        if half_rows >= sublane_pack:
            tile_rows = min(tile_rows, half_rows)
        # Never make a block meaningfully larger than the array itself.
        padded_rows = ((rows + sublane_pack - 1) // sublane_pack) * sublane_pack
        tile_rows = min(tile_rows, padded_rows)
        grid = (pl.cdiv(rows, tile_rows),)

    out = pl.pallas_call(
        _identity_copy_kernel,
        out_shape=jax.ShapeDtypeStruct((rows, lane_width), flat.dtype),
        grid_spec=pltpu.PrefetchScalarGridSpec(
            num_scalar_prefetch=0,
            grid=grid,
            in_specs=[pl.BlockSpec((tile_rows, lane_width), lambda i: (i, 0))],
            out_specs=pl.BlockSpec((tile_rows, lane_width), lambda i: (i, 0)),
        ),
        compiler_params=pltpu.CompilerParams(
            dimension_semantics=("parallel",),
        ),
    )(flat)

    return out.reshape(data.shape)


if __name__ == "__main__":
    key = jax.random.PRNGKey(0)
    # Small example input consistent with a generic policy observation batch.
    x = jax.random.normal(key, (2, 4, 16, 16), dtype=jnp.float32)

    # Default fast path: pure no-op pass-through.
    y_fast = base_policy_forward(x)
    y_fast = jax.block_until_ready(y_fast)
    assert y_fast.shape == x.shape and y_fast.dtype == x.dtype
    assert bool(jnp.array_equal(y_fast, x)), "fast-path identity mismatch"

    # Kernel path: lane-dense tiled Pallas VMEM copy.
    y = base_policy_forward(x, force_kernel=True)
    y = jax.block_until_ready(y)
    assert y.shape == x.shape and y.dtype == x.dtype
    assert bool(jnp.array_equal(y, x)), "kernel identity mismatch"

    print("KERNEL_OK")
</pallas_src>

<mosaic_0001>
module attributes {stable_mosaic.version = 11 : i64} {
  func.func @_identity_copy_kernel(%arg0: i32, %arg1: memref<1x2048xf32, #tpu.memory_space<vmem>>, %arg2: memref<1x2048xf32, #tpu.memory_space<vmem>>) attributes {dimension_semantics = [#tpu.dimension_semantics<parallel>], iteration_bounds = array<i64: 1>, scalar_prefetch = 0 : i64, scratch_operands = 0 : i64, tpu.core_type = #tpu.core_type<tc>, window_params = [{transform_indices = @transform_0, window_bounds = array<i64: 1, 2048>}, {transform_indices = @transform_1, window_bounds = array<i64: 1, 2048>}]} {
    %c0 = arith.constant 0 : index
    %c0_0 = arith.constant 0 : index
    %0 = vector.load %arg1[%c0, %c0_0] : memref<1x2048xf32, #tpu.memory_space<vmem>>, vector<1x2048xf32>
    %c0_1 = arith.constant 0 : index
    %c0_2 = arith.constant 0 : index
    %1 = vector.load %arg2[%c0_1, %c0_2] : memref<1x2048xf32, #tpu.memory_space<vmem>>, vector<1x2048xf32>
    tpu.vector_store %arg2[%c0_1, %c0_2], %0 {strides = array<i32>} : memref<1x2048xf32, #tpu.memory_space<vmem>>, vector<1x2048xf32>,
    return
  }
  func.func @transform_0(%arg0: i32) -> (i32, i32) {
    %c0_i32 = arith.constant 0 : i32
    %c0_i32_0 = arith.constant 0 : i32
    return %arg0, %c0_i32 : i32, i32
  }
  func.func @transform_1(%arg0: i32) -> (i32, i32) {
    %c0_i32 = arith.constant 0 : i32
    %c0_i32_0 = arith.constant 0 : i32
    return %arg0, %c0_i32 : i32, i32
  }
}

</mosaic_0001>

<llo_original>
// kernel: tpu_custom_call.1
$region0: #{tpu_custom_call.1}
  #allocation0 [shape = 'u32[]', space=smem, size = 0x4, offset = 0x4, fixed_abs, tag = 'smem constant byte address 0x4 - core index']
  #allocation1 [shape = 'u32[144,128]{1,0:T(1,128)}', space=vmem, size = 0x12000, scoped, tag = 'internal scratch']
  %s0 = inlined_call_operand.hbm [shape: f32[1,2048], index: 0, kind: input, shape index: {}]
  %s1 = inlined_call_operand.hbm [shape: f32[1,2048], index: 1, kind: output, shape index: {}]
  %s2 = sld [smem:[#allocation0]]
  $region18: #{tpu_custom_call.1} parent=0
    _
  %s4 = ssub.s32 1, %s2
  %s5 = scalar_select 0, %s4, %s2
  $region1: #{tpu_custom_call.1} parent=0
    #allocation2 [shape = 'u8[8192]{0}', space=vmem, size = 0x2000, scoped, tag = 'input window, operand 0, single buffered']
    #allocation3 [shape = 's32[1]{0}', space=sflag, size = 0x4, scoped, tag = 'scoped memory for tpu_custom_call.1']
    #allocation4 [shape = 's32[1]{0}', space=sflag, size = 0x4, scoped, tag = 'scoped memory for tpu_custom_call.1']
    #allocation5 [shape = 'u8[8192]{0}', space=vmem, size = 0x2000, scoped, tag = 'output window, operand 0, single buffered']
    %6 = vsyncpa [#allocation3], 0
    %7 = vsyncpa [#allocation4], 0
    // Predicated region
    $region2: #{tpu_custom_call.1} parent=1 // pred_check
      _
    $region3: #{tpu_custom_call.1} parent=1 // pred_check_branch
      %9 = sbr.rel (0) target = $region5
    $region4: #{tpu_custom_call.1} parent=1 // pred_region
      %s11 = ssub.s32 256, 256
      %12 = vsyncadd [#allocation3], %s11
      %s14 = sshll.u32 [#allocation2], 4
      %s15 = int_to_ptr.vmem [resolvable:$true] %s14
      %17 = dma.hbm_to_vmem [thread:$0]  %s0, 256, %s15, [#allocation3]
    $region5: #{tpu_custom_call.1} parent=1 // pred_fallthru
      _
    // Predicated region
    $region6: #{tpu_custom_call.1} parent=1 // pred_check
      _
    $region7: #{tpu_custom_call.1} parent=1 // pred_check_branch
      %19 = sbr.rel (0) target = $region9
    $region8: #{tpu_custom_call.1} parent=1 // pred_region
      %20 = dma.done [#allocation3], 256
    $region9: #{tpu_custom_call.1} parent=1 // pred_fallthru
      _
    %v21 = vld [vmem:[#allocation2] sm:$0xff]
    %v22 = vld [vmem:[#allocation2 + $0x8] sm:$0xff]
    %23 = vst [vmem:[#allocation5] sm:$0xff] %v21
    %24 = vst [vmem:[#allocation5 + $0x8] sm:$0xff] %v22
    // Predicated region
    $region10: #{tpu_custom_call.1} parent=1 // pred_check
      _
    $region11: #{tpu_custom_call.1} parent=1 // pred_check_branch
      %26 = sbr.rel (0) target = $region13
    $region12: #{tpu_custom_call.1} parent=1 // pred_region
      %s28 = ssub.s32 256, 256
      %29 = vsyncadd [#allocation4], %s28
      %s31 = sshll.u32 [#allocation5], 4
      %s32 = int_to_ptr.vmem [resolvable:$true] %s31
      %34 = dma.vmem_to_hbm [thread:$0]  %s32, 256, %s1, [#allocation4]
    $region13: #{tpu_custom_call.1} parent=1 // pred_fallthru
      _
    // Predicated region
    $region14: #{tpu_custom_call.1} parent=1 // pred_check
      _
    $region15: #{tpu_custom_call.1} parent=1 // pred_check_branch
      %36 = sbr.rel (0) target = $region17
    $region16: #{tpu_custom_call.1} parent=1 // pred_region
      %37 = dma.done [#allocation4], 256
    $region17: #{tpu_custom_call.1} parent=1 // pred_fallthru
      _
    %38 = vsyncpa [#allocation3], 1
    %39 = vsyncpa [#allocation4], 1

</llo_original>
